<compile_context>
chip_gen: v5e
topology: v5e:2x2
jax: 0.10.0
libtpu: 0.0.40
codegen_flags: <defaults>
</compile_context>

<pallas_src>
import functools

import jax
import jax.numpy as jnp
from jax.experimental import pallas as pl
from jax.experimental.pallas import tpu as pltpu

NUM_OBS = 4
NUM_ACT = 2
HIDDEN = 256
K_PAD = 16           # layer-1 contraction padded 4 -> 16 (one bf16 sublane tile)
OUT_PAD = 128        # layer-3 output lanes padded 2 -> 128 (one lane tile)
ROW_GRAIN = 8        # batch rows tiled in multiples of 8 (f32 sublane tile)
LEAKY_SLOPE = 0.01   # PyTorch nn.LeakyReLU default negative_slope


def _leaky_relu(x):
    # vmul + vmax instead of compare + select.
    return jnp.maximum(x, LEAKY_SLOPE * x)


def mlp_kernel(x_ref, w1_ref, b1_ref, w2_ref, b2_ref, w3_ref, b3_ref, o_ref):
    # Layer 1 (4 -> 256, contraction zero-padded to K=16): one cheap bf16 MXU pass.
    xb = x_ref[...].astype(jnp.bfloat16)                               # (tm, 16)
    h = jnp.dot(xb, w1_ref[...], preferred_element_type=jnp.float32) + b1_ref[...]
    h = _leaky_relu(h)

    # Layer 2 (256 -> 256): the dominant matmul; bf16 operands, f32 accumulate.
    h = jnp.dot(h.astype(jnp.bfloat16), w2_ref[...],
                preferred_element_type=jnp.float32) + b2_ref[...]
    h = _leaky_relu(h)

    # Layer 3 (256 -> 2, weights zero-padded to 128 output lanes at init).
    y = jnp.dot(h.astype(jnp.bfloat16), w3_ref[...],
                preferred_element_type=jnp.float32) + b3_ref[...]
    # Store only the 2 real output lanes -> 8 B/row writeback, no wrapper-side slice.
    o_ref[...] = y[:, :NUM_ACT]


def _round_up(n, m):
    return ((n + m - 1) // m) * m


def _cdiv(a, b):
    return -(-a // b)


@functools.partial(jax.jit, static_argnames=("block_rows",))
def net_forward(x, packed_params, *, block_rows=2048):
    """Pallas forward pass for Net. x: (B, 4) float32 -> (B, 2) float32.

    `packed_params` must come from prepare_params() (bf16, padded, done once).
    Note for v5e: if you raise block_rows above ~2048, also set
    pltpu.CompilerParams(vmem_limit_bytes=...) to exceed the 16 MiB scoped default.
    """
    w1, b1, w2, b2, w3, b3 = packed_params
    B = x.shape[0]

    # Balanced batch tiling:
    #  - tiles never exceed block_rows,
    #  - tile sizes stay within one 8-row group of each other (no ~2x padding waste),
    #  - >= 2 tiles whenever B >= 16 so both v7x TensorCores get work from the
    #    "parallel" batch axis.
    n_tiles = max(_cdiv(B, block_rows), 2 if B >= 2 * ROW_GRAIN else 1)
    tm = _round_up(_cdiv(B, n_tiles), ROW_GRAIN)
    grid = _cdiv(B, tm)
    Bp = grid * tm

    # Single fused pad: batch rows up to Bp, observation columns 4 -> K_PAD (zeros).
    x = jnp.pad(x, ((0, Bp - B), (0, K_PAD - NUM_OBS)))

    # Weights/biases: full-array blocks with constant index_map -> fetched once and
    # kept VMEM-resident across all batch tiles.
    resident = lambda a: pl.BlockSpec(a.shape, lambda i: (0,) * a.ndim)

    out = pl.pallas_call(
        mlp_kernel,
        out_shape=jax.ShapeDtypeStruct((Bp, NUM_ACT), jnp.float32),
        grid=(grid,),
        in_specs=[
            pl.BlockSpec((tm, K_PAD), lambda i: (i, 0)),   # streamed activations
            resident(w1), resident(b1),
            resident(w2), resident(b2),
            resident(w3), resident(b3),
        ],
        out_specs=pl.BlockSpec((tm, NUM_ACT), lambda i: (i, 0)),
        compiler_params=pltpu.CompilerParams(
            dimension_semantics=("parallel",),   # shard batch tiles across TCs on v7x
        ),
    )(x, w1, b1, w2, b2, w3, b3)

    return out[:B] if Bp != B else out


def init_params(key):
    """Deterministic init mimicking PyTorch's default Linear init:
    U(-1/sqrt(fan_in), 1/sqrt(fan_in)) for both weights and biases."""
    def linear(key, fan_in, fan_out):
        kw, kb = jax.random.split(key)
        bound = 1.0 / jnp.sqrt(float(fan_in))
        # Stored as (in, out): transposed relative to PyTorch's (out, in).
        w = jax.random.uniform(kw, (fan_in, fan_out), jnp.float32, -bound, bound)
        b = jax.random.uniform(kb, (1, fan_out), jnp.float32, -bound, bound)
        return w, b

    k1, k2, k3 = jax.random.split(key, 3)
    w1, b1 = linear(k1, NUM_OBS, HIDDEN)
    w2, b2 = linear(k2, HIDDEN, HIDDEN)
    w3, b3 = linear(k3, HIDDEN, NUM_ACT)
    return (w1, b1, w2, b2, w3, b3)


def prepare_params(params):
    """One-time kernel packing (hoisted out of the per-call path):
    bf16 weights, layer-1 K padded 4->16, layer-3 N padded 2->128. Biases stay f32."""
    w1, b1, w2, b2, w3, b3 = params
    w1p = jnp.zeros((K_PAD, HIDDEN), jnp.float32).at[:NUM_OBS, :].set(w1)
    w3p = jnp.zeros((HIDDEN, OUT_PAD), jnp.float32).at[:, :NUM_ACT].set(w3)
    b3p = jnp.zeros((1, OUT_PAD), jnp.float32).at[:, :NUM_ACT].set(b3)
    return (w1p.astype(jnp.bfloat16), b1,
            w2.astype(jnp.bfloat16), b2,
            w3p.astype(jnp.bfloat16), b3p)


def net_forward_ref(x, params, *, match_bf16=True):
    """Pure-JAX reference. match_bf16=True mimics the kernel's bf16-operand /
    f32-accumulate matmuls; False is the plain f32 PyTorch-equivalent forward."""
    w1, b1, w2, b2, w3, b3 = params
    c = (lambda a: a.astype(jnp.bfloat16)) if match_bf16 else (lambda a: a)
    h = _leaky_relu(jnp.dot(c(x), c(w1), preferred_element_type=jnp.float32) + b1)
    h = _leaky_relu(jnp.dot(c(h), c(w2), preferred_element_type=jnp.float32) + b2)
    return jnp.dot(c(h), c(w3), preferred_element_type=jnp.float32) + b3


if __name__ == "__main__":
    key = jax.random.PRNGKey(0)
    k_params, k_x1, k_x2 = jax.random.split(key, 3)
    params = init_params(k_params)
    packed = prepare_params(params)   # done once, outside the per-call path

    # Small batch of CartPole observations (single-tile grid).
    B = 8
    x = jax.random.normal(k_x1, (B, NUM_OBS), dtype=jnp.float32)
    out = jax.block_until_ready(net_forward(x, packed))
    assert out.shape == (B, NUM_ACT)
    ref_bf16 = net_forward_ref(x, params, match_bf16=True)
    ref_f32 = net_forward_ref(x, params, match_bf16=False)
    # Tight check against a bf16-matched reference; loose sanity check vs pure f32
    # (the bf16 MXU path is an intentional, documented precision trade).
    assert jnp.allclose(out, ref_bf16, atol=1e-3, rtol=1e-3), float(jnp.abs(out - ref_bf16).max())
    assert jnp.allclose(out, ref_f32, atol=5e-2, rtol=5e-2), float(jnp.abs(out - ref_f32).max())

    # Multi-tile batch grid (3 tiles of 8 rows) exercising the same kernel.
    B2 = 24
    x2 = jax.random.normal(k_x2, (B2, NUM_OBS), dtype=jnp.float32)
    out2 = jax.block_until_ready(net_forward(x2, packed, block_rows=8))
    assert out2.shape == (B2, NUM_ACT)
    ref2 = net_forward_ref(x2, params, match_bf16=True)
    assert jnp.allclose(out2, ref2, atol=1e-3, rtol=1e-3), float(jnp.abs(out2 - ref2).max())

    print("KERNEL_OK")
</pallas_src>

<mosaic_0001>
module attributes {stable_mosaic.version = 11 : i64} {
  func.func @mlp_kernel(%arg0: i32, %arg1: memref<8x16xf32, #tpu.memory_space<vmem>>, %arg2: memref<16x256xbf16, #tpu.memory_space<vmem>>, %arg3: memref<1x256xf32, #tpu.memory_space<vmem>>, %arg4: memref<256x256xbf16, #tpu.memory_space<vmem>>, %arg5: memref<1x256xf32, #tpu.memory_space<vmem>>, %arg6: memref<256x128xbf16, #tpu.memory_space<vmem>>, %arg7: memref<1x128xf32, #tpu.memory_space<vmem>>, %arg8: memref<8x2xf32, #tpu.memory_space<vmem>>) attributes {dimension_semantics = [#tpu.dimension_semantics<parallel>], iteration_bounds = array<i64: 1>, scalar_prefetch = 0 : i64, scratch_operands = 0 : i64, tpu.core_type = #tpu.core_type<tc>, window_params = [{transform_indices = @transform_0, window_bounds = array<i64: 8, 16>}, {pipeline_mode = #tpu.pipeline_mode<synchronous>, transform_indices = @transform_1, window_bounds = array<i64: 16, 256>}, {pipeline_mode = #tpu.pipeline_mode<synchronous>, transform_indices = @transform_2, window_bounds = array<i64: 1, 256>}, {pipeline_mode = #tpu.pipeline_mode<synchronous>, transform_indices = @transform_3, window_bounds = array<i64: 256, 256>}, {pipeline_mode = #tpu.pipeline_mode<synchronous>, transform_indices = @transform_4, window_bounds = array<i64: 1, 256>}, {pipeline_mode = #tpu.pipeline_mode<synchronous>, transform_indices = @transform_5, window_bounds = array<i64: 256, 128>}, {pipeline_mode = #tpu.pipeline_mode<synchronous>, transform_indices = @transform_6, window_bounds = array<i64: 1, 128>}, {transform_indices = @transform_7, window_bounds = array<i64: 8, 2>}]} {
    %c0 = arith.constant 0 : index
    %c0_0 = arith.constant 0 : index
    %0 = vector.load %arg1[%c0, %c0_0] : memref<8x16xf32, #tpu.memory_space<vmem>>, vector<8x16xf32>
    %1 = arith.truncf %0 : vector<8x16xf32> to vector<8x16xbf16>
    %c0_1 = arith.constant 0 : index
    %c0_2 = arith.constant 0 : index
    %2 = vector.load %arg2[%c0_1, %c0_2] : memref<16x256xbf16, #tpu.memory_space<vmem>>, vector<16x256xbf16>
    %cst = arith.constant dense<0.000000e+00> : vector<8x256xf32>
    %3 = tpu.matmul %1, %2, %cst {dimension_numbers = #tpu.dot_dimension_numbers<[1], [0], [0], [1], [0, 0, 1, 1], [], []>} : vector<8x16xbf16>, vector<16x256xbf16>, vector<8x256xf32> -> vector<8x256xf32>
    %c0_3 = arith.constant 0 : index
    %c0_4 = arith.constant 0 : index
    %4 = vector.load %arg3[%c0_3, %c0_4] : memref<1x256xf32, #tpu.memory_space<vmem>>, vector<1x256xf32>
    %5 = vector.broadcast %4 : vector<1x256xf32> to vector<8x256xf32>
    %6 = arith.addf %3, %5 : vector<8x256xf32>
    %cst_5 = arith.constant 0.00999999977 : f32
    %7 = vector.broadcast %cst_5 : f32 to vector<8x256xf32>
    %8 = arith.mulf %7, %6 : vector<8x256xf32>
    %9 = arith.maximumf %6, %8 : vector<8x256xf32>
    %10 = arith.truncf %9 : vector<8x256xf32> to vector<8x256xbf16>
    %c0_6 = arith.constant 0 : index
    %c0_7 = arith.constant 0 : index
    %11 = vector.load %arg4[%c0_6, %c0_7] : memref<256x256xbf16, #tpu.memory_space<vmem>>, vector<256x256xbf16>
    %cst_8 = arith.constant dense<0.000000e+00> : vector<8x256xf32>
    %12 = tpu.matmul %10, %11, %cst_8 {dimension_numbers = #tpu.dot_dimension_numbers<[1], [0], [0], [1], [0, 0, 1, 1], [], []>} : vector<8x256xbf16>, vector<256x256xbf16>, vector<8x256xf32> -> vector<8x256xf32>
    %c0_9 = arith.constant 0 : index
    %c0_10 = arith.constant 0 : index
    %13 = vector.load %arg5[%c0_9, %c0_10] : memref<1x256xf32, #tpu.memory_space<vmem>>, vector<1x256xf32>
    %14 = vector.broadcast %13 : vector<1x256xf32> to vector<8x256xf32>
    %15 = arith.addf %12, %14 : vector<8x256xf32>
    %cst_11 = arith.constant 0.00999999977 : f32
    %16 = vector.broadcast %cst_11 : f32 to vector<8x256xf32>
    %17 = arith.mulf %16, %15 : vector<8x256xf32>
    %18 = arith.maximumf %15, %17 : vector<8x256xf32>
    %19 = arith.truncf %18 : vector<8x256xf32> to vector<8x256xbf16>
    %c0_12 = arith.constant 0 : index
    %c0_13 = arith.constant 0 : index
    %20 = vector.load %arg6[%c0_12, %c0_13] : memref<256x128xbf16, #tpu.memory_space<vmem>>, vector<256x128xbf16>
    %cst_14 = arith.constant dense<0.000000e+00> : vector<8x128xf32>
    %21 = tpu.matmul %19, %20, %cst_14 {dimension_numbers = #tpu.dot_dimension_numbers<[1], [0], [0], [1], [0, 0, 1, 1], [], []>} : vector<8x256xbf16>, vector<256x128xbf16>, vector<8x128xf32> -> vector<8x128xf32>
    %c0_15 = arith.constant 0 : index
    %c0_16 = arith.constant 0 : index
    %22 = vector.load %arg7[%c0_15, %c0_16] : memref<1x128xf32, #tpu.memory_space<vmem>>, vector<1x128xf32>
    %23 = vector.broadcast %22 : vector<1x128xf32> to vector<8x128xf32>
    %24 = arith.addf %21, %23 : vector<8x128xf32>
    %25 = vector.extract_strided_slice %24 {offsets = [0, 0], sizes = [8, 2], strides = [1, 1]} : vector<8x128xf32> to vector<8x2xf32>
    %c0_17 = arith.constant 0 : index
    %c0_18 = arith.constant 0 : index
    %26 = vector.load %arg8[%c0_17, %c0_18] : memref<8x2xf32, #tpu.memory_space<vmem>>, vector<8x2xf32>
    tpu.vector_store %arg8[%c0_17, %c0_18], %25 {strides = array<i32>} : memref<8x2xf32, #tpu.memory_space<vmem>>, vector<8x2xf32>,
    return
  }
  func.func @transform_0(%arg0: i32) -> (i32, i32) {
    %c0_i32 = arith.constant 0 : i32
    %c0_i32_0 = arith.constant 0 : i32
    return %arg0, %c0_i32 : i32, i32
  }
  func.func @transform_1(%arg0: i32) -> (i32, i32) {
    %c0_i32 = arith.constant 0 : i32
    %c0_i32_0 = arith.constant 0 : i32
    %c0_i32_1 = arith.constant 0 : i32
    return %c0_i32, %c0_i32_0 : i32, i32
  }
  func.func @transform_2(%arg0: i32) -> (i32, i32) {
    %c0_i32 = arith.constant 0 : i32
    %c0_i32_0 = arith.constant 0 : i32
    %c0_i32_1 = arith.constant 0 : i32
    return %c0_i32, %c0_i32_0 : i32, i32
  }
  func.func @transform_3(%arg0: i32) -> (i32, i32) {
    %c0_i32 = arith.constant 0 : i32
    %c0_i32_0 = arith.constant 0 : i32
    %c0_i32_1 = arith.constant 0 : i32
    return %c0_i32, %c0_i32_0 : i32, i32
  }
  func.func @transform_4(%arg0: i32) -> (i32, i32) {
    %c0_i32 = arith.constant 0 : i32
    %c0_i32_0 = arith.constant 0 : i32
    %c0_i32_1 = arith.constant 0 : i32
    return %c0_i32, %c0_i32_0 : i32, i32
  }
  func.func @transform_5(%arg0: i32) -> (i32, i32) {
    %c0_i32 = arith.constant 0 : i32
    %c0_i32_0 = arith.constant 0 : i32
    %c0_i32_1 = arith.constant 0 : i32
    return %c0_i32, %c0_i32_0 : i32, i32
  }
  func.func @transform_6(%arg0: i32) -> (i32, i32) {
    %c0_i32 = arith.constant 0 : i32
    %c0_i32_0 = arith.constant 0 : i32
    %c0_i32_1 = arith.constant 0 : i32
    return %c0_i32, %c0_i32_0 : i32, i32
  }
  func.func @transform_7(%arg0: i32) -> (i32, i32) {
    %c0_i32 = arith.constant 0 : i32
    %c0_i32_0 = arith.constant 0 : i32
    return %arg0, %c0_i32 : i32, i32
  }
}

</mosaic_0001>

<llo_original>
// kernel: net_forward.1
$region0: #{net_forward.1}
  #allocation0 [shape = 'u32[]', space=smem, size = 0x4, offset = 0x4, fixed_abs, tag = 'smem constant byte address 0x4 - core index']
  #allocation1 [shape = 'u32[72,128]{1,0:T(1,128)}', space=vmem, size = 0x9000, scoped, tag = 'internal scratch']
  %s0 = inlined_call_operand.vmem [shape: f32[8,16], index: 0, kind: input, shape index: {}]
  %s1 = inlined_call_operand.vmem [shape: bf16[16,256], index: 1, kind: input, shape index: {}]
  %s2 = inlined_call_operand.vmem [shape: f32[1,256], index: 2, kind: input, shape index: {}]
  %s3 = inlined_call_operand.hbm [shape: bf16[256,256], index: 3, kind: input, shape index: {}]
  %s4 = inlined_call_operand.vmem [shape: f32[1,256], index: 4, kind: input, shape index: {}]
  %s5 = inlined_call_operand.hbm [shape: bf16[256,128], index: 5, kind: input, shape index: {}]
  %s6 = inlined_call_operand.vmem [shape: f32[1,128], index: 6, kind: input, shape index: {}]
  %s7 = inlined_call_operand.vmem [shape: f32[8,2], index: 7, kind: output, shape index: {}]
  %s8 = sld [smem:[#allocation0]]
  $region46: #{net_forward.1} parent=0
    _
  %s10 = ssub.s32 1, %s8
  %s11 = scalar_select 0, %s10, %s8
  $region1: #{net_forward.1} parent=0
    #allocation2 [shape = 'u8[131072]{0}', space=vmem, size = 0x20000, scoped, tag = 'input window, operand 3, single buffered']
    #allocation3 [shape = 's32[1]{0}', space=sflag, size = 0x4, scoped, tag = 'scoped memory for net_forward.1']
    #allocation4 [shape = 'u8[65536]{0}', space=vmem, size = 0x10000, scoped, tag = 'input window, operand 5, single buffered']
    #allocation5 [shape = 's32[1]{0}', space=sflag, size = 0x4, scoped, tag = 'scoped memory for net_forward.1']
    %12 = vsyncpa [#allocation3], 0
    %13 = vsyncpa [#allocation5], 0
    // Predicated region
    $region2: #{net_forward.1} parent=1 // pred_check
      _
    $region3: #{net_forward.1} parent=1 // pred_check_branch
      %15 = sbr.rel (0) target = $region5
    $region4: #{net_forward.1} parent=1 // pred_region
      _
    $region5: #{net_forward.1} parent=1 // pred_fallthru
      _
    // Predicated region
    $region6: #{net_forward.1} parent=1 // pred_check
      _
    $region7: #{net_forward.1} parent=1 // pred_check_branch
      %17 = sbr.rel (0) target = $region9
    $region8: #{net_forward.1} parent=1 // pred_region
      _
    $region9: #{net_forward.1} parent=1 // pred_fallthru
      _
    // Predicated region
    $region10: #{net_forward.1} parent=1 // pred_check
      _
    $region11: #{net_forward.1} parent=1 // pred_check_branch
      %19 = sbr.rel (0) target = $region13
    $region12: #{net_forward.1} parent=1 // pred_region
      _
    $region13: #{net_forward.1} parent=1 // pred_fallthru
      _
    // Predicated region
    $region14: #{net_forward.1} parent=1 // pred_check
      _
    $region15: #{net_forward.1} parent=1 // pred_check_branch
      %21 = sbr.rel (0) target = $region17
    $region16: #{net_forward.1} parent=1 // pred_region
      %23 = vsyncadd [#allocation3], 0
      %s24 = sshll.u32 %s3, 4
      %s25 = int_to_ptr.hbm [resolvable:$true] %s24
      %s26 = sshll.u32 [#allocation2], 4
      %s27 = int_to_ptr.vmem [resolvable:$true] %s26
      %32 = dma.hbm_to_vmem [thread:$0]  %s25, 4096, %s27, [#allocation3], 128, 128, 8
    $region17: #{net_forward.1} parent=1 // pred_fallthru
      _
    // Predicated region
    $region18: #{net_forward.1} parent=1 // pred_check
      _
    $region19: #{net_forward.1} parent=1 // pred_check_branch
      %34 = sbr.rel (0) target = $region21
    $region20: #{net_forward.1} parent=1 // pred_region
      _
    $region21: #{net_forward.1} parent=1 // pred_fallthru
      _
    // Predicated region
    $region22: #{net_forward.1} parent=1 // pred_check
      _
    $region23: #{net_forward.1} parent=1 // pred_check_branch
      %36 = sbr.rel (0) target = $region25
    $region24: #{net_forward.1} parent=1 // pred_region
      %38 = vsyncadd [#allocation5], 0
      %s39 = sshll.u32 %s5, 4
      %s40 = int_to_ptr.hbm [resolvable:$true] %s39
      %s41 = sshll.u32 [#allocation4], 4
      %s42 = int_to_ptr.vmem [resolvable:$true] %s41
      %47 = dma.hbm_to_vmem [thread:$0]  %s40, 2048, %s42, [#allocation5], 64, 64, 4
    $region25: #{net_forward.1} parent=1 // pred_fallthru
      _
    // Predicated region
    $region26: #{net_forward.1} parent=1 // pred_check
      _
    $region27: #{net_forward.1} parent=1 // pred_check_branch
      %49 = sbr.rel (0) target = $region29
    $region28: #{net_forward.1} parent=1 // pred_region
      _
    $region29: #{net_forward.1} parent=1 // pred_fallthru
      _
    // Predicated region
    $region30: #{net_forward.1} parent=1 // pred_check
      _
    $region31: #{net_forward.1} parent=1 // pred_check_branch
      %51 = sbr.rel (0) target = $region33
    $region32: #{net_forward.1} parent=1 // pred_region
      %53 = dma.done [#allocation3], 4096
    $region33: #{net_forward.1} parent=1 // pred_fallthru
      _
    // Predicated region
    $region34: #{net_forward.1} parent=1 // pred_check
      _
    $region35: #{net_forward.1} parent=1 // pred_check_branch
      %55 = sbr.rel (0) target = $region37
    $region36: #{net_forward.1} parent=1 // pred_region
      %57 = dma.done [#allocation5], 2048
    $region37: #{net_forward.1} parent=1 // pred_fallthru
      _
    %v59 = vld [vmem:[%s0] sm:$0xff]
    %v60 = vpack.c.bf16 %v59, %v59
    %v61 = vld [vmem:[%s1] sm:$0xff]
    %v62 = vld [vmem:[%s1 + $0x8] sm:$0xff]
    %v63 = vld [vmem:[%s2] sm:$0x3]
    %v65 = vperm.slane %v63, 0
    %v66 = vperm.slane %v63, 1
    %v71 = vunpack.c.l.b16 %v61
    %v72 = vunpack.c.h.b16 %v61
    %v73 = vunpack.c.l.b16 %v62
    %v74 = vunpack.c.h.b16 %v62
    %v75 = vpack.c.b16 %v73, %v71
    %v76 = vpack.c.b16 %v74, %v72
    %vm79 = vcmask 130048
    %v81 = vsel %vm79, %v60, 0
    %83 = vmatpush.bf16.msra.mxu0 0
    %84 = vmatpush.bf16.msra.mxu0 0
    %85 = vmatpush.bf16.msra.mxu0 0
    %86 = vmatpush.bf16.msra.mxu0 0
    %87 = vmatpush.bf16.msra.mxu0 0
    %88 = vmatpush.bf16.msra.mxu0 0
    %89 = vmatpush.bf16.msra.mxu0 0
    %90 = vmatpush.bf16.msra.mxu0 %v75
    %91 = vmatmul.bf16.gmra.mxu0 %v81
    %v92 = vpop.f32.mrf.mxu0
    %v93 = vadd.f32 %v65, %v92
    %v94 = vpop.f32.mrf.mxu0
    %95 = vdwg.mxu0
    %96 = vmatpush.bf16.msra.mxu0 0
    %97 = vmatpush.bf16.msra.mxu0 0
    %98 = vmatpush.bf16.msra.mxu0 0
    %99 = vmatpush.bf16.msra.mxu0 0
    %100 = vmatpush.bf16.msra.mxu0 0
    %101 = vmatpush.bf16.msra.mxu0 0
    %102 = vmatpush.bf16.msra.mxu0 0
    %103 = vmatpush.bf16.msra.mxu0 %v76
    %104 = vmatmul.bf16.gmra.mxu0 %v81
    %v105 = vpop.f32.mrf.mxu0
    %v106 = vadd.f32 %v66, %v105
    %v107 = vpop.f32.mrf.mxu0
    %108 = vdwg.mxu0
    %v109 = vmul.f32 %v93, 0.01
    %v110 = vmul.f32 %v106, 0.01
    %v111 = vmax.f32 %v93, %v109
    %v112 = vmax.f32 %v106, %v110
    %v113 = vpack.c.bf16 %v111, %v111
    %v114 = vpack.c.bf16 %v112, %v112
    %v115 = vld [vmem:[#allocation2] sm:$0xff]
    %v116 = vld [vmem:[#allocation2 + $0x8] sm:$0xff]
    %v117 = vld [vmem:[#allocation2 + $0x10] sm:$0xff]
    %v118 = vld [vmem:[#allocation2 + $0x18] sm:$0xff]
    %v119 = vld [vmem:[#allocation2 + $0x20] sm:$0xff]
    %v120 = vld [vmem:[#allocation2 + $0x28] sm:$0xff]
    %v121 = vld [vmem:[#allocation2 + $0x30] sm:$0xff]
    %v122 = vld [vmem:[#allocation2 + $0x38] sm:$0xff]
    %v123 = vld [vmem:[#allocation2 + $0x40] sm:$0xff]
    %v124 = vld [vmem:[#allocation2 + $0x48] sm:$0xff]
    %v125 = vld [vmem:[#allocation2 + $0x50] sm:$0xff]
    %v126 = vld [vmem:[#allocation2 + $0x58] sm:$0xff]
    %v127 = vld [vmem:[#allocation2 + $0x60] sm:$0xff]
    %v128 = vld [vmem:[#allocation2 + $0x68] sm:$0xff]
    %v129 = vld [vmem:[#allocation2 + $0x70] sm:$0xff]
    %v130 = vld [vmem:[#allocation2 + $0x78] sm:$0xff]
    %v131 = vld [vmem:[#allocation2 + $0x80] sm:$0xff]
    %v132 = vld [vmem:[#allocation2 + $0x88] sm:$0xff]
    %v133 = vld [vmem:[#allocation2 + $0x90] sm:$0xff]
    %v134 = vld [vmem:[#allocation2 + $0x98] sm:$0xff]
    %v135 = vld [vmem:[#allocation2 + $0xa0] sm:$0xff]
    %v136 = vld [vmem:[#allocation2 + $0xa8] sm:$0xff]
    %v137 = vld [vmem:[#allocation2 + $0xb0] sm:$0xff]
    %v138 = vld [vmem:[#allocation2 + $0xb8] sm:$0xff]
    %v139 = vld [vmem:[#allocation2 + $0xc0] sm:$0xff]
    %v140 = vld [vmem:[#allocation2 + $0xc8] sm:$0xff]
    %v141 = vld [vmem:[#allocation2 + $0xd0] sm:$0xff]
    %v142 = vld [vmem:[#allocation2 + $0xd8] sm:$0xff]
    %v143 = vld [vmem:[#allocation2 + $0xe0] sm:$0xff]
    %v144 = vld [vmem:[#allocation2 + $0xe8] sm:$0xff]
    %v145 = vld [vmem:[#allocation2 + $0xf0] sm:$0xff]
    %v146 = vld [vmem:[#allocation2 + $0xf8] sm:$0xff]
    %v147 = vld [vmem:[%s4] sm:$0x3]
    %v149 = vperm.slane %v147, 0
    %v150 = vperm.slane %v147, 1
    %v185 = vunpack.c.l.b16 %v115
    %v186 = vunpack.c.h.b16 %v115
    %v187 = vunpack.c.l.b16 %v116
    %v188 = vunpack.c.h.b16 %v116
    %v189 = vunpack.c.l.b16 %v117
    %v190 = vunpack.c.h.b16 %v117
    %v191 = vunpack.c.l.b16 %v118
    %v192 = vunpack.c.h.b16 %v118
    %v193 = vunpack.c.l.b16 %v119
    %v194 = vunpack.c.h.b16 %v119
    %v195 = vunpack.c.l.b16 %v120
    %v196 = vunpack.c.h.b16 %v120
    %v197 = vunpack.c.l.b16 %v121
    %v198 = vunpack.c.h.b16 %v121
    %v199 = vunpack.c.l.b16 %v122
    %v200 = vunpack.c.h.b16 %v122
    %v201 = vunpack.c.l.b16 %v123
    %v202 = vunpack.c.h.b16 %v123
    %v203 = vunpack.c.l.b16 %v124
    %v204 = vunpack.c.h.b16 %v124
    %v205 = vunpack.c.l.b16 %v125
    %v206 = vunpack.c.h.b16 %v125
    %v207 = vunpack.c.l.b16 %v126
    %v208 = vunpack.c.h.b16 %v126
    %v209 = vunpack.c.l.b16 %v127
    %v210 = vunpack.c.h.b16 %v127
    %v211 = vunpack.c.l.b16 %v128
    %v212 = vunpack.c.h.b16 %v128
    %v213 = vunpack.c.l.b16 %v129
    %v214 = vunpack.c.h.b16 %v129
    %v215 = vunpack.c.l.b16 %v130
    %v216 = vunpack.c.h.b16 %v130
    %v217 = vunpack.c.l.b16 %v131
    %v218 = vunpack.c.h.b16 %v131
    %v219 = vunpack.c.l.b16 %v132
    %v220 = vunpack.c.h.b16 %v132
    %v221 = vunpack.c.l.b16 %v133
    %v222 = vunpack.c.h.b16 %v133
    %v223 = vunpack.c.l.b16 %v134
    %v224 = vunpack.c.h.b16 %v134
    %v225 = vunpack.c.l.b16 %v135
    %v226 = vunpack.c.h.b16 %v135
    %v227 = vunpack.c.l.b16 %v136
    %v228 = vunpack.c.h.b16 %v136
    %v229 = vunpack.c.l.b16 %v137
    %v230 = vunpack.c.h.b16 %v137
    %v231 = vunpack.c.l.b16 %v138
    %v232 = vunpack.c.h.b16 %v138
    %v233 = vunpack.c.l.b16 %v139
    %v234 = vunpack.c.h.b16 %v139
    %v235 = vunpack.c.l.b16 %v140
    %v236 = vunpack.c.h.b16 %v140
    %v237 = vunpack.c.l.b16 %v141
    %v238 = vunpack.c.h.b16 %v141
    %v239 = vunpack.c.l.b16 %v142
    %v240 = vunpack.c.h.b16 %v142
    %v241 = vunpack.c.l.b16 %v143
    %v242 = vunpack.c.h.b16 %v143
    %v243 = vunpack.c.l.b16 %v144
    %v244 = vunpack.c.h.b16 %v144
    %v245 = vunpack.c.l.b16 %v145
    %v246 = vunpack.c.h.b16 %v145
    %v247 = vunpack.c.l.b16 %v146
    %v248 = vunpack.c.h.b16 %v146
    %v249 = vpack.c.b16 %v187, %v185
    %v250 = vpack.c.b16 %v188, %v186
    %v251 = vpack.c.b16 %v191, %v189
    %v252 = vpack.c.b16 %v192, %v190
    %v253 = vpack.c.b16 %v195, %v193
    %v254 = vpack.c.b16 %v196, %v194
    %v255 = vpack.c.b16 %v199, %v197
    %v256 = vpack.c.b16 %v200, %v198
    %v257 = vpack.c.b16 %v203, %v201
    %v258 = vpack.c.b16 %v204, %v202
    %v259 = vpack.c.b16 %v207, %v205
    %v260 = vpack.c.b16 %v208, %v206
    %v261 = vpack.c.b16 %v211, %v209
    %v262 = vpack.c.b16 %v212, %v210
    %v263 = vpack.c.b16 %v215, %v213
    %v264 = vpack.c.b16 %v216, %v214
    %v265 = vpack.c.b16 %v219, %v217
    %v266 = vpack.c.b16 %v220, %v218
    %v267 = vpack.c.b16 %v223, %v221
    %v268 = vpack.c.b16 %v224, %v222
    %v269 = vpack.c.b16 %v227, %v225
    %v270 = vpack.c.b16 %v228, %v226
    %v271 = vpack.c.b16 %v231, %v229
    %v272 = vpack.c.b16 %v232, %v230
    %v273 = vpack.c.b16 %v235, %v233
    %v274 = vpack.c.b16 %v236, %v234
    %v275 = vpack.c.b16 %v239, %v237
    %v276 = vpack.c.b16 %v240, %v238
    %v277 = vpack.c.b16 %v243, %v241
    %v278 = vpack.c.b16 %v244, %v242
    %v279 = vpack.c.b16 %v247, %v245
    %v280 = vpack.c.b16 %v248, %v246
    %313 = vmatpush.bf16.msra.mxu0 %v263
    %314 = vmatpush.bf16.msra.mxu0 %v261
    %315 = vmatpush.bf16.msra.mxu0 %v259
    %316 = vmatpush.bf16.msra.mxu0 %v257
    %317 = vmatpush.bf16.msra.mxu0 %v255
    %318 = vmatpush.bf16.msra.mxu0 %v253
    %319 = vmatpush.bf16.msra.mxu0 %v251
    %320 = vmatpush.bf16.msra.mxu0 %v249
    %321 = vmatmul.bf16.gmra.mxu0 %v113
    %v322 = vpop.f32.mrf.mxu0
    %v323 = vadd.f32 %v149, %v322
    %v324 = vpop.f32.mrf.mxu0
    %325 = vdwg.mxu0
    %326 = vmatpush.bf16.msra.mxu0 %v279
    %327 = vmatpush.bf16.msra.mxu0 %v277
    %328 = vmatpush.bf16.msra.mxu0 %v275
    %329 = vmatpush.bf16.msra.mxu0 %v273
    %330 = vmatpush.bf16.msra.mxu0 %v271
    %331 = vmatpush.bf16.msra.mxu0 %v269
    %332 = vmatpush.bf16.msra.mxu0 %v267
    %333 = vmatpush.bf16.msra.mxu0 %v265
    %334 = vmatmul.bf16.gmra.mxu0 %v114
    %v335 = vpop.f32.mrf.mxu0
    %v336 = vadd.f32 %v323, %v335
    %v337 = vpop.f32.mrf.mxu0
    %338 = vdwg.mxu0
    %339 = vmatpush.bf16.msra.mxu0 %v264
    %340 = vmatpush.bf16.msra.mxu0 %v262
    %341 = vmatpush.bf16.msra.mxu0 %v260
    %342 = vmatpush.bf16.msra.mxu0 %v258
    %343 = vmatpush.bf16.msra.mxu0 %v256
    %344 = vmatpush.bf16.msra.mxu0 %v254
    %345 = vmatpush.bf16.msra.mxu0 %v252
    %346 = vmatpush.bf16.msra.mxu0 %v250
    %347 = vmatmul.bf16.gmra.mxu0 %v113
    %v348 = vpop.f32.mrf.mxu0
    %v349 = vadd.f32 %v150, %v348
    %v350 = vpop.f32.mrf.mxu0
    %351 = vdwg.mxu0
    %352 = vmatpush.bf16.msra.mxu0 %v280
    %353 = vmatpush.bf16.msra.mxu0 %v278
    %354 = vmatpush.bf16.msra.mxu0 %v276
    %355 = vmatpush.bf16.msra.mxu0 %v274
    %356 = vmatpush.bf16.msra.mxu0 %v272
    %357 = vmatpush.bf16.msra.mxu0 %v270
    %358 = vmatpush.bf16.msra.mxu0 %v268
    %359 = vmatpush.bf16.msra.mxu0 %v266
    %360 = vmatmul.bf16.gmra.mxu0 %v114
    %v361 = vpop.f32.mrf.mxu0
    %v362 = vadd.f32 %v349, %v361
    %v363 = vpop.f32.mrf.mxu0
    %364 = vdwg.mxu0
    %v365 = vmul.f32 %v336, 0.01
    %v366 = vmul.f32 %v362, 0.01
    %v367 = vmax.f32 %v336, %v365
    %v368 = vmax.f32 %v362, %v366
    %v369 = vpack.c.bf16 %v367, %v367
    %v370 = vpack.c.bf16 %v368, %v368
    %v371 = vld [vmem:[#allocation4] sm:$0xf]
    %v372 = vld [vmem:[#allocation4 + $0x4] sm:$0xf]
    %v373 = vld [vmem:[#allocation4 + $0x8] sm:$0xf]
    %v374 = vld [vmem:[#allocation4 + $0xc] sm:$0xf]
    %v375 = vld [vmem:[#allocation4 + $0x10] sm:$0xf]
    %v376 = vld [vmem:[#allocation4 + $0x14] sm:$0xf]
    %v377 = vld [vmem:[#allocation4 + $0x18] sm:$0xf]
    %v378 = vld [vmem:[#allocation4 + $0x1c] sm:$0xf]
    %v379 = vld [vmem:[#allocation4 + $0x20] sm:$0xf]
    %v380 = vld [vmem:[#allocation4 + $0x24] sm:$0xf]
    %v381 = vld [vmem:[#allocation4 + $0x28] sm:$0xf]
    %v382 = vld [vmem:[#allocation4 + $0x2c] sm:$0xf]
    %v383 = vld [vmem:[#allocation4 + $0x30] sm:$0xf]
    %v384 = vld [vmem:[#allocation4 + $0x34] sm:$0xf]
    %v385 = vld [vmem:[#allocation4 + $0x38] sm:$0xf]
    %v386 = vld [vmem:[#allocation4 + $0x3c] sm:$0xf]
    %v387 = vld [vmem:[#allocation4 + $0x40] sm:$0xf]
    %v388 = vld [vmem:[#allocation4 + $0x44] sm:$0xf]
    %v389 = vld [vmem:[#allocation4 + $0x48] sm:$0xf]
    %v390 = vld [vmem:[#allocation4 + $0x4c] sm:$0xf]
    %v391 = vld [vmem:[#allocation4 + $0x50] sm:$0xf]
    %v392 = vld [vmem:[#allocation4 + $0x54] sm:$0xf]
    %v393 = vld [vmem:[#allocation4 + $0x58] sm:$0xf]
    %v394 = vld [vmem:[#allocation4 + $0x5c] sm:$0xf]
    %v395 = vld [vmem:[#allocation4 + $0x60] sm:$0xf]
    %v396 = vld [vmem:[#allocation4 + $0x64] sm:$0xf]
    %v397 = vld [vmem:[#allocation4 + $0x68] sm:$0xf]
    %v398 = vld [vmem:[#allocation4 + $0x6c] sm:$0xf]
    %v399 = vld [vmem:[#allocation4 + $0x70] sm:$0xf]
    %v400 = vld [vmem:[#allocation4 + $0x74] sm:$0xf]
    %v401 = vld [vmem:[#allocation4 + $0x78] sm:$0xf]
    %v402 = vld [vmem:[#allocation4 + $0x7c] sm:$0xf]
    %v403 = vld [vmem:[%s6] sm:$0x1]
    %v405 = vperm.slane %v403, 0
    %v439 = vunpack.c.l.b16 %v371
    %v440 = vunpack.c.l.b16 %v372
    %v441 = vunpack.c.l.b16 %v373
    %v442 = vunpack.c.l.b16 %v374
    %v443 = vunpack.c.l.b16 %v375
    %v444 = vunpack.c.l.b16 %v376
    %v445 = vunpack.c.l.b16 %v377
    %v446 = vunpack.c.l.b16 %v378
    %v447 = vunpack.c.l.b16 %v379
    %v448 = vunpack.c.l.b16 %v380
    %v449 = vunpack.c.l.b16 %v381
    %v450 = vunpack.c.l.b16 %v382
    %v451 = vunpack.c.l.b16 %v383
    %v452 = vunpack.c.l.b16 %v384
    %v453 = vunpack.c.l.b16 %v385
    %v454 = vunpack.c.l.b16 %v386
    %v455 = vunpack.c.l.b16 %v387
    %v456 = vunpack.c.l.b16 %v388
    %v457 = vunpack.c.l.b16 %v389
    %v458 = vunpack.c.l.b16 %v390
    %v459 = vunpack.c.l.b16 %v391
    %v460 = vunpack.c.l.b16 %v392
    %v461 = vunpack.c.l.b16 %v393
    %v462 = vunpack.c.l.b16 %v394
    %v463 = vunpack.c.l.b16 %v395
    %v464 = vunpack.c.l.b16 %v396
    %v465 = vunpack.c.l.b16 %v397
    %v466 = vunpack.c.l.b16 %v398
    %v467 = vunpack.c.l.b16 %v399
    %v468 = vunpack.c.l.b16 %v400
    %v469 = vunpack.c.l.b16 %v401
    %v470 = vunpack.c.l.b16 %v402
    %v471 = vpack.c.b16 %v440, %v439
    %v472 = vpack.c.b16 %v442, %v441
    %v473 = vpack.c.b16 %v444, %v443
    %v474 = vpack.c.b16 %v446, %v445
    %v475 = vpack.c.b16 %v448, %v447
    %v476 = vpack.c.b16 %v450, %v449
    %v477 = vpack.c.b16 %v452, %v451
    %v478 = vpack.c.b16 %v454, %v453
    %v479 = vpack.c.b16 %v456, %v455
    %v480 = vpack.c.b16 %v458, %v457
    %v481 = vpack.c.b16 %v460, %v459
    %v482 = vpack.c.b16 %v462, %v461
    %v483 = vpack.c.b16 %v464, %v463
    %v484 = vpack.c.b16 %v466, %v465
    %v485 = vpack.c.b16 %v468, %v467
    %v486 = vpack.c.b16 %v470, %v469
    %503 = vmatpush.bf16.msra.mxu0 %v478
    %504 = vmatpush.bf16.msra.mxu0 %v477
    %505 = vmatpush.bf16.msra.mxu0 %v476
    %506 = vmatpush.bf16.msra.mxu0 %v475
    %507 = vmatpush.bf16.msra.mxu0 %v474
    %508 = vmatpush.bf16.msra.mxu0 %v473
    %509 = vmatpush.bf16.msra.mxu0 %v472
    %510 = vmatpush.bf16.msra.mxu0 %v471
    %511 = vmatmul.bf16.gmra.mxu0 %v369
    %v512 = vpop.f32.mrf.mxu0
    %v513 = vadd.f32 %v405, %v512
    %v514 = vpop.f32.mrf.mxu0
    %515 = vdwg.mxu0
    %516 = vmatpush.bf16.msra.mxu0 %v486
    %517 = vmatpush.bf16.msra.mxu0 %v485
    %518 = vmatpush.bf16.msra.mxu0 %v484
    %519 = vmatpush.bf16.msra.mxu0 %v483
    %520 = vmatpush.bf16.msra.mxu0 %v482
    %521 = vmatpush.bf16.msra.mxu0 %v481
    %522 = vmatpush.bf16.msra.mxu0 %v480
    %523 = vmatpush.bf16.msra.mxu0 %v479
    %524 = vmatmul.bf16.gmra.mxu0 %v370
    %v525 = vpop.f32.mrf.mxu0
    %v526 = vadd.f32 %v513, %v525
    %v527 = vpop.f32.mrf.mxu0
    %528 = vdwg.mxu0
    %vm529 = vcmask 15360
    %530 = vst.msk [vmem:[%s7] sm:$0xff] %vm529, %v526
    // Predicated region
    $region38: #{net_forward.1} parent=1 // pred_check
      _
    $region39: #{net_forward.1} parent=1 // pred_check_branch
      %532 = sbr.rel (0) target = $region41
    $region40: #{net_forward.1} parent=1 // pred_region
      _
    $region41: #{net_forward.1} parent=1 // pred_fallthru
      _
    // Predicated region
    $region42: #{net_forward.1} parent=1 // pred_check
      _
    $region43: #{net_forward.1} parent=1 // pred_check_branch
      %534 = sbr.rel (0) target = $region45
    $region44: #{net_forward.1} parent=1 // pred_region
      _
    $region45: #{net_forward.1} parent=1 // pred_fallthru
      _
    %535 = vsyncpa [#allocation3], 1
    %536 = vsyncpa [#allocation5], 1

</llo_original>
